<compile_context>
chip_gen: v5e
topology: v5e:2x2
jax: 0.10.0
libtpu: 0.0.40
codegen_flags: <defaults>
</compile_context>

<pallas_src>
import jax
import jax.numpy as jnp
from jax.experimental import pallas as pl
from jax.experimental.pallas import tpu as pltpu


def _round_up(x, m):
    return ((x + m - 1) // m) * m


def _pad_to(a, axis, target):
    pad = target - a.shape[axis]
    if pad == 0:
        return a
    widths = [(0, 0)] * a.ndim
    widths[axis] = (0, pad)
    return jnp.pad(a, widths)


def _make_mlp2_kernel(sub, n_sub):
    """Kernel for one batch tile; rows processed in `n_sub` chunks of `sub` rows."""

    def kernel(x_ref, w1_ref, b1_ref, w2_ref, b2_ref, w3_ref, b3_ref, o_ref):
        # Weights/biases are resident in VMEM (constant index maps); load them
        # once per grid step, outside the row-chunk loop.
        w1 = w1_ref[...]; b1 = b1_ref[...]
        w2 = w2_ref[...]; b2 = b2_ref[...]
        w3 = w3_ref[...]; b3 = b3_ref[...]
        mm_dtype = w1.dtype  # matmul operand dtype (f32 or bf16)

        def body(s, carry):
            r = pl.multiple_of(s * sub, sub)
            xs = x_ref[pl.ds(r, sub), :]                       # already mm_dtype
            # fc1 + ReLU (MXU matmul, f32 accumulate; elementwise stays f32).
            h1 = jnp.dot(xs, w1, preferred_element_type=jnp.float32)
            h1 = jnp.maximum(h1 + b1, 0.0)
            # fc2 + ReLU
            h2 = jnp.dot(h1.astype(mm_dtype), w2, preferred_element_type=jnp.float32)
            h2 = jnp.maximum(h2 + b2, 0.0)
            # fc3 (no activation)
            h3 = jnp.dot(h2.astype(mm_dtype), w3, preferred_element_type=jnp.float32)
            o_ref[pl.ds(r, sub), :] = (h3 + b3).astype(o_ref.dtype)
            return carry

        jax.lax.fori_loop(0, n_sub, body, 0, unroll=True)

    return kernel


_V7X_VMEM_BUDGET_BYTES = 48 << 20  # conservative: v7x has 64 MiB VMEM per TC


def mlp2_forward(x, w1, b1, w2, b2, w3, b3, *, tm=256,
                 matmul_dtype=jnp.bfloat16, out_dtype=jnp.float32):
    """MLP2Layer forward: relu(relu(x@w1+b1)@w2+b2)@w3+b3.

    x: [B, n_input]; w_i: [in_i, out_i] (pre-transposed vs nn.Linear); b_i: [1, out_i].
    matmul_dtype: MXU operand dtype (bf16 recommended on v6e/v7x; pass
      jnp.float32 if strict f32 parity with the reference is required).
    """
    B, n_input = x.shape
    H1, H2, n_output = w1.shape[1], w2.shape[1], w3.shape[1]

    # --- pad hidden/output widths to multiples of 128 -> lane-dense layouts
    #     everywhere. Zero padding is semantically inert: relu(0 + 0) = 0 and
    #     zero rows/cols contribute nothing to the next matmul.
    H1p = _round_up(H1, 128)
    H2p = _round_up(H2, 128)
    Np = _round_up(n_output, 128)
    w1 = _pad_to(w1, 1, H1p)
    b1 = _pad_to(b1, 1, H1p)
    w2 = _pad_to(_pad_to(w2, 0, H1p), 1, H2p)
    b2 = _pad_to(b2, 1, H2p)
    w3 = _pad_to(_pad_to(w3, 0, H2p), 1, Np)
    b3 = _pad_to(b3, 1, Np)

    # --- matmul operand dtype: cast x + weights (halves weight VMEM and x DMA
    #     when bf16); biases and all elementwise math stay f32 (v5e-safe).
    x = x.astype(matmul_dtype)
    w1 = w1.astype(matmul_dtype)
    w2 = w2.astype(matmul_dtype)
    w3 = w3.astype(matmul_dtype)
    b1 = b1.astype(jnp.float32)
    b2 = b2.astype(jnp.float32)
    b3 = b3.astype(jnp.float32)

    # --- batch tiling: large tiles amortize the ~0.35us/step grid overhead,
    #     but keep >=2 tiles when the batch allows so the "parallel" axis can
    #     shard across both v7x TensorCores. TM multiple of 16 for bf16 packing.
    n_tiles = max(1, pl.cdiv(B, tm))
    TM = _round_up(pl.cdiv(B, n_tiles), 16)
    B_pad = _round_up(B, TM)
    n_tiles = B_pad // TM
    if B_pad != B:
        x = jnp.pad(x, ((0, B_pad - B), (0, 0)))

    # Row sub-chunks inside a tile bound vreg live ranges (h1/h2 live as values).
    SUB = 128 if TM % 128 == 0 else TM
    n_sub = TM // SUB

    # --- VMEM footprint, budget guard, and explicit scoped-VMEM limit --------
    mm_bytes = jnp.dtype(matmul_dtype).itemsize
    ob = jnp.dtype(out_dtype).itemsize
    weight_bytes = ((w1.size + w2.size + w3.size) * mm_bytes
                    + (b1.size + b2.size + b3.size) * 4)
    io_bytes = 2 * TM * (n_input * mm_bytes + Np * ob)   # double-buffered x/out tiles
    act_bytes = 2 * SUB * (H1p + H2p) * 4                # f32 intermediates / spill headroom
    # 2x weights = worst case if the single-buffer request is not honored.
    footprint = 2 * weight_bytes + io_bytes + act_bytes
    if footprint > _V7X_VMEM_BUDGET_BYTES:
        # TODO(synk): fall back to tiling the weight matrices (extra "arbitrary"
        # grid axes over H1/H2/N with a pltpu.VMEM f32 accumulator) instead of
        # full residency when the weights exceed the v7x VMEM budget.
        raise ValueError(
            f"resident-weight footprint {footprint / 2**20:.1f} MiB exceeds the "
            f"{_V7X_VMEM_BUDGET_BYTES >> 20} MiB VMEM budget; weight-tiling "
            "fallback not implemented for this configuration.")
    vmem_limit = min(max(int(footprint * 1.5), 32 << 20), 64 << 20)

    flops = 2 * B_pad * (n_input * H1p + H1p * H2p + H2p * Np)
    bytes_accessed = (B_pad * n_input * mm_bytes + B_pad * Np * ob + weight_bytes)

    kernel = _make_mlp2_kernel(SUB, n_sub)

    def run(single_buffer_weights):
        def resident(arr):
            # Constant index map -> DMA'd once, held in VMEM across all tiles.
            kwargs = {}
            if single_buffer_weights:
                # Skip the useless second pipeline buffer for resident arrays.
                kwargs["pipeline_mode"] = pl.Buffered(1)
            return pl.BlockSpec(arr.shape, lambda i: (0, 0), **kwargs)

        return pl.pallas_call(
            kernel,
            out_shape=jax.ShapeDtypeStruct((B_pad, Np), out_dtype),
            grid_spec=pltpu.PrefetchScalarGridSpec(
                num_scalar_prefetch=0,
                grid=(n_tiles,),
                in_specs=[
                    pl.BlockSpec((TM, n_input), lambda i: (i, 0)),
                    resident(w1), resident(b1),
                    resident(w2), resident(b2),
                    resident(w3), resident(b3),
                ],
                out_specs=pl.BlockSpec((TM, Np), lambda i: (i, 0)),
            ),
            compiler_params=pltpu.CompilerParams(
                # Batch tiles are independent -> shard across TCs on v7x.
                dimension_semantics=("parallel",),
                vmem_limit_bytes=vmem_limit,
            ),
            cost_estimate=pl.CostEstimate(
                flops=flops, transcendentals=0, bytes_accessed=bytes_accessed),
        )(x, w1, b1, w2, b2, w3, b3)

    try:
        out = run(single_buffer_weights=True)
    except Exception:
        # pl.Buffered(1) not supported by this jax/Mosaic build: fall back to
        # default double-buffered resident weights (same results, more VMEM).
        out = run(single_buffer_weights=False)

    return out[:B, :n_output]


def init_params(key, n_input, n_hidden_1, n_hidden_2, n_output):
    """Deterministic init mimicking nn.Linear (uniform(-1/sqrt(fan_in), +))."""
    ks = jax.random.split(key, 6)

    def linear(kw, kb, fan_in, fan_out):
        bound = 1.0 / float(fan_in) ** 0.5
        # stored pre-transposed: [fan_in, fan_out]
        w = jax.random.uniform(kw, (fan_in, fan_out), jnp.float32, -bound, bound)
        b = jax.random.uniform(kb, (1, fan_out), jnp.float32, -bound, bound)
        return w, b

    w1, b1 = linear(ks[0], ks[1], n_input, n_hidden_1)
    w2, b2 = linear(ks[2], ks[3], n_hidden_1, n_hidden_2)
    w3, b3 = linear(ks[4], ks[5], n_hidden_2, n_output)
    return w1, b1, w2, b2, w3, b3


def reference_forward(x, w1, b1, w2, b2, w3, b3):
    h1 = jnp.maximum(x @ w1 + b1, 0.0)
    h2 = jnp.maximum(h1 @ w2 + b2, 0.0)
    return h2 @ w3 + b3


if __name__ == "__main__":
    key = jax.random.PRNGKey(0)
    k_x1, k_x2, k_p = jax.random.split(key, 3)

    n_input, n_hidden_1, n_hidden_2, n_output = 16, 32, 32, 8
    params = init_params(k_p, n_input, n_hidden_1, n_hidden_2, n_output)

    # Case 1: tiny batch, f32 matmul operands -> strict check vs reference.
    x_small = jax.random.normal(k_x1, (8, n_input), dtype=jnp.float32)
    out_small = jax.block_until_ready(
        mlp2_forward(x_small, *params, matmul_dtype=jnp.float32))
    ref_small = reference_forward(x_small, *params)
    assert out_small.shape == (8, n_output)
    assert jnp.allclose(out_small, ref_small, atol=1e-4, rtol=1e-4), \
        "mismatch vs reference (small batch, f32)"

    # Case 2: batch not a multiple of the tile -> pad + 2-tile grid, f32 path.
    x_big = jax.random.normal(k_x2, (300, n_input), dtype=jnp.float32)
    out_big = jax.block_until_ready(
        mlp2_forward(x_big, *params, matmul_dtype=jnp.float32))
    ref_big = reference_forward(x_big, *params)
    assert out_big.shape == (300, n_output)
    assert jnp.allclose(out_big, ref_big, atol=1e-4, rtol=1e-4), \
        "mismatch vs reference (tiled batch, f32)"

    # Case 3: default bf16 MXU operands (v6e/v7x fast path) -> looser tolerance.
    out_bf16 = jax.block_until_ready(mlp2_forward(x_big, *params))
    assert out_bf16.shape == (300, n_output)
    assert jnp.allclose(out_bf16, ref_big, atol=5e-2, rtol=5e-2), \
        "mismatch vs reference (tiled batch, bf16 matmuls)"

    print("KERNEL_OK")
</pallas_src>

<mosaic_0001>
module attributes {stable_mosaic.version = 11 : i64} {
  func.func @kernel(%arg0: i32, %arg1: memref<16x16xf32, #tpu.memory_space<vmem>>, %arg2: memref<16x128xf32, #tpu.memory_space<vmem>>, %arg3: memref<1x128xf32, #tpu.memory_space<vmem>>, %arg4: memref<128x128xf32, #tpu.memory_space<vmem>>, %arg5: memref<1x128xf32, #tpu.memory_space<vmem>>, %arg6: memref<128x128xf32, #tpu.memory_space<vmem>>, %arg7: memref<1x128xf32, #tpu.memory_space<vmem>>, %arg8: memref<16x128xf32, #tpu.memory_space<vmem>>) attributes {dimension_semantics = [#tpu.dimension_semantics<parallel>], iteration_bounds = array<i64: 1>, scalar_prefetch = 0 : i64, scratch_operands = 0 : i64, tpu.core_type = #tpu.core_type<tc>, window_params = [{transform_indices = @transform_0, window_bounds = array<i64: 16, 16>}, {pipeline_mode = #tpu.pipeline_mode<synchronous>, transform_indices = @transform_1, window_bounds = array<i64: 16, 128>}, {pipeline_mode = #tpu.pipeline_mode<synchronous>, transform_indices = @transform_2, window_bounds = array<i64: 1, 128>}, {pipeline_mode = #tpu.pipeline_mode<synchronous>, transform_indices = @transform_3, window_bounds = array<i64: 128, 128>}, {pipeline_mode = #tpu.pipeline_mode<synchronous>, transform_indices = @transform_4, window_bounds = array<i64: 1, 128>}, {pipeline_mode = #tpu.pipeline_mode<synchronous>, transform_indices = @transform_5, window_bounds = array<i64: 128, 128>}, {pipeline_mode = #tpu.pipeline_mode<synchronous>, transform_indices = @transform_6, window_bounds = array<i64: 1, 128>}, {transform_indices = @transform_7, window_bounds = array<i64: 16, 128>}]} {
    %c0 = arith.constant 0 : index
    %c0_0 = arith.constant 0 : index
    %0 = vector.load %arg2[%c0, %c0_0] : memref<16x128xf32, #tpu.memory_space<vmem>>, vector<16x128xf32>
    %c0_1 = arith.constant 0 : index
    %c0_2 = arith.constant 0 : index
    %1 = vector.load %arg3[%c0_1, %c0_2] : memref<1x128xf32, #tpu.memory_space<vmem>>, vector<1x128xf32>
    %c0_3 = arith.constant 0 : index
    %c0_4 = arith.constant 0 : index
    %2 = vector.load %arg4[%c0_3, %c0_4] : memref<128x128xf32, #tpu.memory_space<vmem>>, vector<128x128xf32>
    %c0_5 = arith.constant 0 : index
    %c0_6 = arith.constant 0 : index
    %3 = vector.load %arg5[%c0_5, %c0_6] : memref<1x128xf32, #tpu.memory_space<vmem>>, vector<1x128xf32>
    %c0_7 = arith.constant 0 : index
    %c0_8 = arith.constant 0 : index
    %4 = vector.load %arg6[%c0_7, %c0_8] : memref<128x128xf32, #tpu.memory_space<vmem>>, vector<128x128xf32>
    %c0_9 = arith.constant 0 : index
    %c0_10 = arith.constant 0 : index
    %5 = vector.load %arg7[%c0_9, %c0_10] : memref<1x128xf32, #tpu.memory_space<vmem>>, vector<1x128xf32>
    %c0_i32 = arith.constant 0 : i32
    %c16_i32 = arith.constant 16 : i32
    %6 = arith.muli %c0_i32, %c16_i32 : i32
    %7 = tpu.assume_multiple %6, 16 : i32
    %8 = arith.index_cast %7 : i32 to index
    %c0_11 = arith.constant 0 : index
    %9 = vector.load %arg1[%8, %c0_11] : memref<16x16xf32, #tpu.memory_space<vmem>>, vector<16x16xf32>
    %cst = arith.constant dense<0.000000e+00> : vector<16x128xf32>
    %10 = tpu.matmul %9, %0, %cst {dimension_numbers = #tpu.dot_dimension_numbers<[1], [0], [0], [1], [0, 0, 1, 1], [], []>} : vector<16x16xf32>, vector<16x128xf32>, vector<16x128xf32> -> vector<16x128xf32>
    %11 = vector.broadcast %1 : vector<1x128xf32> to vector<16x128xf32>
    %12 = arith.addf %10, %11 : vector<16x128xf32>
    %cst_12 = arith.constant 0.000000e+00 : f32
    %13 = vector.broadcast %cst_12 : f32 to vector<16x128xf32>
    %14 = arith.maximumf %12, %13 : vector<16x128xf32>
    %cst_13 = arith.constant dense<0.000000e+00> : vector<16x128xf32>
    %15 = tpu.matmul %14, %2, %cst_13 {dimension_numbers = #tpu.dot_dimension_numbers<[1], [0], [0], [1], [0, 0, 1, 1], [], []>} : vector<16x128xf32>, vector<128x128xf32>, vector<16x128xf32> -> vector<16x128xf32>
    %16 = vector.broadcast %3 : vector<1x128xf32> to vector<16x128xf32>
    %17 = arith.addf %15, %16 : vector<16x128xf32>
    %cst_14 = arith.constant 0.000000e+00 : f32
    %18 = vector.broadcast %cst_14 : f32 to vector<16x128xf32>
    %19 = arith.maximumf %17, %18 : vector<16x128xf32>
    %cst_15 = arith.constant dense<0.000000e+00> : vector<16x128xf32>
    %20 = tpu.matmul %19, %4, %cst_15 {dimension_numbers = #tpu.dot_dimension_numbers<[1], [0], [0], [1], [0, 0, 1, 1], [], []>} : vector<16x128xf32>, vector<128x128xf32>, vector<16x128xf32> -> vector<16x128xf32>
    %21 = vector.broadcast %5 : vector<1x128xf32> to vector<16x128xf32>
    %22 = arith.addf %20, %21 : vector<16x128xf32>
    %23 = arith.index_cast %7 : i32 to index
    %c0_16 = arith.constant 0 : index
    %24 = vector.load %arg8[%23, %c0_16] : memref<16x128xf32, #tpu.memory_space<vmem>>, vector<16x128xf32>
    tpu.vector_store %arg8[%23, %c0_16], %22 {strides = array<i32>} : memref<16x128xf32, #tpu.memory_space<vmem>>, vector<16x128xf32>,
    %c1_i32 = arith.constant 1 : i32
    return
  }
  func.func @transform_0(%arg0: i32) -> (i32, i32) {
    %c0_i32 = arith.constant 0 : i32
    %c0_i32_0 = arith.constant 0 : i32
    return %arg0, %c0_i32 : i32, i32
  }
  func.func @transform_1(%arg0: i32) -> (i32, i32) {
    %c0_i32 = arith.constant 0 : i32
    %c0_i32_0 = arith.constant 0 : i32
    %c0_i32_1 = arith.constant 0 : i32
    return %c0_i32, %c0_i32_0 : i32, i32
  }
  func.func @transform_2(%arg0: i32) -> (i32, i32) {
    %c0_i32 = arith.constant 0 : i32
    %c0_i32_0 = arith.constant 0 : i32
    %c0_i32_1 = arith.constant 0 : i32
    return %c0_i32, %c0_i32_0 : i32, i32
  }
  func.func @transform_3(%arg0: i32) -> (i32, i32) {
    %c0_i32 = arith.constant 0 : i32
    %c0_i32_0 = arith.constant 0 : i32
    %c0_i32_1 = arith.constant 0 : i32
    return %c0_i32, %c0_i32_0 : i32, i32
  }
  func.func @transform_4(%arg0: i32) -> (i32, i32) {
    %c0_i32 = arith.constant 0 : i32
    %c0_i32_0 = arith.constant 0 : i32
    %c0_i32_1 = arith.constant 0 : i32
    return %c0_i32, %c0_i32_0 : i32, i32
  }
  func.func @transform_5(%arg0: i32) -> (i32, i32) {
    %c0_i32 = arith.constant 0 : i32
    %c0_i32_0 = arith.constant 0 : i32
    %c0_i32_1 = arith.constant 0 : i32
    return %c0_i32, %c0_i32_0 : i32, i32
  }
  func.func @transform_6(%arg0: i32) -> (i32, i32) {
    %c0_i32 = arith.constant 0 : i32
    %c0_i32_0 = arith.constant 0 : i32
    %c0_i32_1 = arith.constant 0 : i32
    return %c0_i32, %c0_i32_0 : i32, i32
  }
  func.func @transform_7(%arg0: i32) -> (i32, i32) {
    %c0_i32 = arith.constant 0 : i32
    %c0_i32_0 = arith.constant 0 : i32
    return %arg0, %c0_i32 : i32, i32
  }
}

module attributes {stable_mosaic.version = 11 : i64} {
  func.func @kernel(%arg0: i32, %arg1: memref<16x16xf32, #tpu.memory_space<vmem>>, %arg2: memref<16x128xf32, #tpu.memory_space<vmem>>, %arg3: memref<1x128xf32, #tpu.memory_space<vmem>>, %arg4: memref<128x128xf32, #tpu.memory_space<vmem>>, %arg5: memref<1x128xf32, #tpu.memory_space<vmem>>, %arg6: memref<128x128xf32, #tpu.memory_space<vmem>>, %arg7: memref<1x128xf32, #tpu.memory_space<vmem>>, %arg8: memref<16x128xf32, #tpu.memory_space<vmem>>) attributes {dimension_semantics = [#tpu.dimension_semantics<parallel>], iteration_bounds = array<i64: 1>, scalar_prefetch = 0 : i64, scratch_operands = 0 : i64, tpu.core_type = #tpu.core_type<tc>, window_params = [{transform_indices = @transform_0, window_bounds = array<i64: 16, 16>}, {pipeline_mode = #tpu.pipeline_mode<synchronous>, transform_indices = @transform_1, window_bounds = array<i64: 16, 128>}, {pipeline_mode = #tpu.pipeline_mode<synchronous>, transform_indices = @transform_2, window_bounds = array<i64: 1, 128>}, {pipeline_mode = #tpu.pipeline_mode<synchronous>, transform_indices = @transform_3, window_bounds = array<i64: 128, 128>}, {pipeline_mode = #tpu.pipeline_mode<synchronous>, transform_indices = @transform_4, window_bounds = array<i64: 1, 128>}, {pipeline_mode = #tpu.pipeline_mode<synchronous>, transform_indices = @transform_5, window_bounds = array<i64: 128, 128>}, {pipeline_mode = #tpu.pipeline_mode<synchronous>, transform_indices = @transform_6, window_bounds = array<i64: 1, 128>}, {transform_indices = @transform_7, window_bounds = array<i64: 16, 128>}]} {
    %c0 = arith.constant 0 : index
    %c0_0 = arith.constant 0 : index
    %0 = vector.load %arg2[%c0, %c0_0] : memref<16x128xf32, #tpu.memory_space<vmem>>, vector<16x128xf32>
    %c0_1 = arith.constant 0 : index
    %c0_2 = arith.constant 0 : index
    %1 = vector.load %arg3[%c0_1, %c0_2] : memref<1x128xf32, #tpu.memory_space<vmem>>, vector<1x128xf32>
    %c0_3 = arith.constant 0 : index
    %c0_4 = arith.constant 0 : index
    %2 = vector.load %arg4[%c0_3, %c0_4] : memref<128x128xf32, #tpu.memory_space<vmem>>, vector<128x128xf32>
    %c0_5 = arith.constant 0 : index
    %c0_6 = arith.constant 0 : index
    %3 = vector.load %arg5[%c0_5, %c0_6] : memref<1x128xf32, #tpu.memory_space<vmem>>, vector<1x128xf32>
    %c0_7 = arith.constant 0 : index
    %c0_8 = arith.constant 0 : index
    %4 = vector.load %arg6[%c0_7, %c0_8] : memref<128x128xf32, #tpu.memory_space<vmem>>, vector<128x128xf32>
    %c0_9 = arith.constant 0 : index
    %c0_10 = arith.constant 0 : index
    %5 = vector.load %arg7[%c0_9, %c0_10] : memref<1x128xf32, #tpu.memory_space<vmem>>, vector<1x128xf32>
    %c0_i32 = arith.constant 0 : i32
    %c16_i32 = arith.constant 16 : i32
    %6 = arith.muli %c0_i32, %c16_i32 : i32
    %7 = tpu.assume_multiple %6, 16 : i32
    %8 = arith.index_cast %7 : i32 to index
    %c0_11 = arith.constant 0 : index
    %9 = vector.load %arg1[%8, %c0_11] : memref<16x16xf32, #tpu.memory_space<vmem>>, vector<16x16xf32>
    %cst = arith.constant dense<0.000000e+00> : vector<16x128xf32>
    %10 = tpu.matmul %9, %0, %cst {dimension_numbers = #tpu.dot_dimension_numbers<[1], [0], [0], [1], [0, 0, 1, 1], [], []>} : vector<16x16xf32>, vector<16x128xf32>, vector<16x128xf32> -> vector<16x128xf32>
    %11 = vector.broadcast %1 : vector<1x128xf32> to vector<16x128xf32>
    %12 = arith.addf %10, %11 : vector<16x128xf32>
    %cst_12 = arith.constant 0.000000e+00 : f32
    %13 = vector.broadcast %cst_12 : f32 to vector<16x128xf32>
    %14 = arith.maximumf %12, %13 : vector<16x128xf32>
    %cst_13 = arith.constant dense<0.000000e+00> : vector<16x128xf32>
    %15 = tpu.matmul %14, %2, %cst_13 {dimension_numbers = #tpu.dot_dimension_numbers<[1], [0], [0], [1], [0, 0, 1, 1], [], []>} : vector<16x128xf32>, vector<128x128xf32>, vector<16x128xf32> -> vector<16x128xf32>
    %16 = vector.broadcast %3 : vector<1x128xf32> to vector<16x128xf32>
    %17 = arith.addf %15, %16 : vector<16x128xf32>
    %cst_14 = arith.constant 0.000000e+00 : f32
    %18 = vector.broadcast %cst_14 : f32 to vector<16x128xf32>
    %19 = arith.maximumf %17, %18 : vector<16x128xf32>
    %cst_15 = arith.constant dense<0.000000e+00> : vector<16x128xf32>
    %20 = tpu.matmul %19, %4, %cst_15 {dimension_numbers = #tpu.dot_dimension_numbers<[1], [0], [0], [1], [0, 0, 1, 1], [], []>} : vector<16x128xf32>, vector<128x128xf32>, vector<16x128xf32> -> vector<16x128xf32>
    %21 = vector.broadcast %5 : vector<1x128xf32> to vector<16x128xf32>
    %22 = arith.addf %20, %21 : vector<16x128xf32>
    %23 = arith.index_cast %7 : i32 to index
    %c0_16 = arith.constant 0 : index
    %24 = vector.load %arg8[%23, %c0_16] : memref<16x128xf32, #tpu.memory_space<vmem>>, vector<16x128xf32>
    tpu.vector_store %arg8[%23, %c0_16], %22 {strides = array<i32>} : memref<16x128xf32, #tpu.memory_space<vmem>>, vector<16x128xf32>,
    %c1_i32 = arith.constant 1 : i32
    return
  }
  func.func @transform_0(%arg0: i32) -> (i32, i32) {
    %c0_i32 = arith.constant 0 : i32
    %c0_i32_0 = arith.constant 0 : i32
    return %arg0, %c0_i32 : i32, i32
  }
  func.func @transform_1(%arg0: i32) -> (i32, i32) {
    %c0_i32 = arith.constant 0 : i32
    %c0_i32_0 = arith.constant 0 : i32
    %c0_i32_1 = arith.constant 0 : i32
    return %c0_i32, %c0_i32_0 : i32, i32
  }
  func.func @transform_2(%arg0: i32) -> (i32, i32) {
    %c0_i32 = arith.constant 0 : i32
    %c0_i32_0 = arith.constant 0 : i32
    %c0_i32_1 = arith.constant 0 : i32
    return %c0_i32, %c0_i32_0 : i32, i32
  }
  func.func @transform_3(%arg0: i32) -> (i32, i32) {
    %c0_i32 = arith.constant 0 : i32
    %c0_i32_0 = arith.constant 0 : i32
    %c0_i32_1 = arith.constant 0 : i32
    return %c0_i32, %c0_i32_0 : i32, i32
  }
  func.func @transform_4(%arg0: i32) -> (i32, i32) {
    %c0_i32 = arith.constant 0 : i32
    %c0_i32_0 = arith.constant 0 : i32
    %c0_i32_1 = arith.constant 0 : i32
    return %c0_i32, %c0_i32_0 : i32, i32
  }
  func.func @transform_5(%arg0: i32) -> (i32, i32) {
    %c0_i32 = arith.constant 0 : i32
    %c0_i32_0 = arith.constant 0 : i32
    %c0_i32_1 = arith.constant 0 : i32
    return %c0_i32, %c0_i32_0 : i32, i32
  }
  func.func @transform_6(%arg0: i32) -> (i32, i32) {
    %c0_i32 = arith.constant 0 : i32
    %c0_i32_0 = arith.constant 0 : i32
    %c0_i32_1 = arith.constant 0 : i32
    return %c0_i32, %c0_i32_0 : i32, i32
  }
  func.func @transform_7(%arg0: i32) -> (i32, i32) {
    %c0_i32 = arith.constant 0 : i32
    %c0_i32_0 = arith.constant 0 : i32
    return %arg0, %c0_i32 : i32, i32
  }
}

</mosaic_0001>

<llo_original>
// kernel: tpu_custom_call.1
$region0: #{tpu_custom_call.1}
  #allocation0 [shape = 'u32[]', space=smem, size = 0x4, offset = 0x4, fixed_abs, tag = 'smem constant byte address 0x4 - core index']
  #allocation1 [shape = 'u32[72,128]{1,0:T(1,128)}', space=vmem, size = 0x9000, scoped, tag = 'internal scratch']
  %s0 = inlined_call_operand.hbm [shape: f32[16,16], index: 0, kind: input, shape index: {}]
  %s1 = inlined_call_operand.hbm [shape: f32[16,128], index: 1, kind: input, shape index: {}]
  %s2 = inlined_call_operand.vmem [shape: f32[1,128], index: 2, kind: input, shape index: {}]
  %s3 = inlined_call_operand.hbm [shape: f32[128,128], index: 3, kind: input, shape index: {}]
  %s4 = inlined_call_operand.vmem [shape: f32[1,128], index: 4, kind: input, shape index: {}]
  %s5 = inlined_call_operand.hbm [shape: f32[128,128], index: 5, kind: input, shape index: {}]
  %s6 = inlined_call_operand.vmem [shape: f32[1,128], index: 6, kind: input, shape index: {}]
  %s7 = inlined_call_operand.hbm [shape: f32[16,128], index: 7, kind: output, shape index: {}]
  %s8 = sld [smem:[#allocation0]]
  $region54: #{tpu_custom_call.1} parent=0
    _
  %s10 = ssub.s32 1, %s8
  %s11 = scalar_select 0, %s10, %s8
  $region1: #{tpu_custom_call.1} parent=0
    #allocation2 [shape = 'u8[8192]{0}', space=vmem, size = 0x2000, scoped, tag = 'input window, operand 0, single buffered']
    #allocation3 [shape = 's32[1]{0}', space=sflag, size = 0x4, scoped, tag = 'scoped memory for tpu_custom_call.1']
    #allocation4 [shape = 's32[1]{0}', space=sflag, size = 0x4, scoped, tag = 'scoped memory for tpu_custom_call.1']
    #allocation5 [shape = 'u8[8192]{0}', space=vmem, size = 0x2000, scoped, tag = 'input window, operand 1, single buffered']
    #allocation6 [shape = 's32[1]{0}', space=sflag, size = 0x4, scoped, tag = 'scoped memory for tpu_custom_call.1']
    #allocation7 [shape = 'u8[65536]{0}', space=vmem, size = 0x10000, scoped, tag = 'input window, operand 3, single buffered']
    #allocation8 [shape = 'u8[65536]{0}', space=vmem, size = 0x10000, scoped, tag = 'input window, operand 5, single buffered']
    #allocation9 [shape = 's32[1]{0}', space=sflag, size = 0x4, scoped, tag = 'scoped memory for tpu_custom_call.1']
    #allocation10 [shape = 'u8[8192]{0}', space=vmem, size = 0x2000, scoped, tag = 'output window, operand 0, single buffered']
    %12 = vsyncpa [#allocation3], 0
    %13 = vsyncpa [#allocation6], 0
    %14 = vsyncpa [#allocation9], 0
    %15 = vsyncpa [#allocation4], 0
    // Predicated region
    $region2: #{tpu_custom_call.1} parent=1 // pred_check
      _
    $region3: #{tpu_custom_call.1} parent=1 // pred_check_branch
      %17 = sbr.rel (0) target = $region5
    $region4: #{tpu_custom_call.1} parent=1 // pred_region
      %19 = vsyncadd [#allocation3], 0
      %s20 = sshll.u32 %s0, 4
      %s21 = int_to_ptr.hbm [resolvable:$true] %s20
      %s22 = sshll.u32 [#allocation2], 4
      %s23 = int_to_ptr.vmem [resolvable:$true] %s22
      %28 = dma.hbm_to_vmem [thread:$0]  %s21, 256, %s23, [#allocation3], 128, 128, 8
    $region5: #{tpu_custom_call.1} parent=1 // pred_fallthru
      _
    // Predicated region
    $region6: #{tpu_custom_call.1} parent=1 // pred_check
      _
    $region7: #{tpu_custom_call.1} parent=1 // pred_check_branch
      %30 = sbr.rel (0) target = $region9
    $region8: #{tpu_custom_call.1} parent=1 // pred_region
      %32 = vsyncadd [#allocation6], 0
      %s33 = sshll.u32 %s1, 4
      %s34 = int_to_ptr.hbm [resolvable:$true] %s33
      %s35 = sshll.u32 [#allocation5], 4
      %s36 = int_to_ptr.vmem [resolvable:$true] %s35
      %41 = dma.hbm_to_vmem [thread:$0]  %s34, 256, %s36, [#allocation6], 128, 128, 8
    $region9: #{tpu_custom_call.1} parent=1 // pred_fallthru
      _
    // Predicated region
    $region10: #{tpu_custom_call.1} parent=1 // pred_check
      _
    $region11: #{tpu_custom_call.1} parent=1 // pred_check_branch
      %43 = sbr.rel (0) target = $region13
    $region12: #{tpu_custom_call.1} parent=1 // pred_region
      _
    $region13: #{tpu_custom_call.1} parent=1 // pred_fallthru
      _
    // Predicated region
    $region14: #{tpu_custom_call.1} parent=1 // pred_check
      _
    $region15: #{tpu_custom_call.1} parent=1 // pred_check_branch
      %45 = sbr.rel (0) target = $region17
    $region16: #{tpu_custom_call.1} parent=1 // pred_region
      %47 = vsyncadd [#allocation6], 0
      %s48 = sshll.u32 %s3, 4
      %s49 = int_to_ptr.hbm [resolvable:$true] %s48
      %s50 = sshll.u32 [#allocation7], 4
      %s51 = int_to_ptr.vmem [resolvable:$true] %s50
      %56 = dma.hbm_to_vmem [thread:$0]  %s49, 2048, %s51, [#allocation6], 128, 128, 8
    $region17: #{tpu_custom_call.1} parent=1 // pred_fallthru
      _
    // Predicated region
    $region18: #{tpu_custom_call.1} parent=1 // pred_check
      _
    $region19: #{tpu_custom_call.1} parent=1 // pred_check_branch
      %58 = sbr.rel (0) target = $region21
    $region20: #{tpu_custom_call.1} parent=1 // pred_region
      _
    $region21: #{tpu_custom_call.1} parent=1 // pred_fallthru
      _
    // Predicated region
    $region22: #{tpu_custom_call.1} parent=1 // pred_check
      _
    $region23: #{tpu_custom_call.1} parent=1 // pred_check_branch
      %60 = sbr.rel (0) target = $region25
    $region24: #{tpu_custom_call.1} parent=1 // pred_region
      %62 = vsyncadd [#allocation9], 0
      %s63 = sshll.u32 %s5, 4
      %s64 = int_to_ptr.hbm [resolvable:$true] %s63
      %s65 = sshll.u32 [#allocation8], 4
      %s66 = int_to_ptr.vmem [resolvable:$true] %s65
      %71 = dma.hbm_to_vmem [thread:$0]  %s64, 2048, %s66, [#allocation9], 128, 128, 8
    $region25: #{tpu_custom_call.1} parent=1 // pred_fallthru
      _
    // Predicated region
    $region26: #{tpu_custom_call.1} parent=1 // pred_check
      _
    $region27: #{tpu_custom_call.1} parent=1 // pred_check_branch
      %73 = sbr.rel (0) target = $region29
    $region28: #{tpu_custom_call.1} parent=1 // pred_region
      _
    $region29: #{tpu_custom_call.1} parent=1 // pred_fallthru
      _
    // Predicated region
    $region30: #{tpu_custom_call.1} parent=1 // pred_check
      _
    $region31: #{tpu_custom_call.1} parent=1 // pred_check_branch
      %75 = sbr.rel (0) target = $region33
    $region32: #{tpu_custom_call.1} parent=1 // pred_region
      %77 = dma.done [#allocation3], 256
    $region33: #{tpu_custom_call.1} parent=1 // pred_fallthru
      _
    // Predicated region
    $region34: #{tpu_custom_call.1} parent=1 // pred_check
      _
    $region35: #{tpu_custom_call.1} parent=1 // pred_check_branch
      %79 = sbr.rel (0) target = $region37
    $region36: #{tpu_custom_call.1} parent=1 // pred_region
      %81 = dma.done [#allocation6], 256
    $region37: #{tpu_custom_call.1} parent=1 // pred_fallthru
      _
    // Predicated region
    $region38: #{tpu_custom_call.1} parent=1 // pred_check
      _
    $region39: #{tpu_custom_call.1} parent=1 // pred_check_branch
      %83 = sbr.rel (0) target = $region41
    $region40: #{tpu_custom_call.1} parent=1 // pred_region
      %85 = dma.done [#allocation6], 2048
    $region41: #{tpu_custom_call.1} parent=1 // pred_fallthru
      _
    // Predicated region
    $region42: #{tpu_custom_call.1} parent=1 // pred_check
      _
    $region43: #{tpu_custom_call.1} parent=1 // pred_check_branch
      %87 = sbr.rel (0) target = $region45
    $region44: #{tpu_custom_call.1} parent=1 // pred_region
      %89 = dma.done [#allocation9], 2048
    $region45: #{tpu_custom_call.1} parent=1 // pred_fallthru
      _
    %v90 = vld [vmem:[#allocation5] sm:$0xff]
    %v91 = vld [vmem:[#allocation5 + $0x8] sm:$0xff]
    %v92 = vld [vmem:[%s2] sm:$0x1]
    %v93 = vld [vmem:[#allocation7] sm:$0xff]
    %v94 = vld [vmem:[#allocation7 + $0x8] sm:$0xff]
    %v95 = vld [vmem:[#allocation7 + $0x10] sm:$0xff]
    %v96 = vld [vmem:[#allocation7 + $0x18] sm:$0xff]
    %v97 = vld [vmem:[#allocation7 + $0x20] sm:$0xff]
    %v98 = vld [vmem:[#allocation7 + $0x28] sm:$0xff]
    %v99 = vld [vmem:[#allocation7 + $0x30] sm:$0xff]
    %v100 = vld [vmem:[#allocation7 + $0x38] sm:$0xff]
    %v101 = vld [vmem:[#allocation7 + $0x40] sm:$0xff]
    %v102 = vld [vmem:[#allocation7 + $0x48] sm:$0xff]
    %v103 = vld [vmem:[#allocation7 + $0x50] sm:$0xff]
    %v104 = vld [vmem:[#allocation7 + $0x58] sm:$0xff]
    %v105 = vld [vmem:[#allocation7 + $0x60] sm:$0xff]
    %v106 = vld [vmem:[#allocation7 + $0x68] sm:$0xff]
    %v107 = vld [vmem:[#allocation7 + $0x70] sm:$0xff]
    %v108 = vld [vmem:[#allocation7 + $0x78] sm:$0xff]
    %v109 = vld [vmem:[%s4] sm:$0x1]
    %v110 = vld [vmem:[#allocation8] sm:$0xff]
    %v111 = vld [vmem:[#allocation8 + $0x8] sm:$0xff]
    %v112 = vld [vmem:[#allocation8 + $0x10] sm:$0xff]
    %v113 = vld [vmem:[#allocation8 + $0x18] sm:$0xff]
    %v114 = vld [vmem:[#allocation8 + $0x20] sm:$0xff]
    %v115 = vld [vmem:[#allocation8 + $0x28] sm:$0xff]
    %v116 = vld [vmem:[#allocation8 + $0x30] sm:$0xff]
    %v117 = vld [vmem:[#allocation8 + $0x38] sm:$0xff]
    %v118 = vld [vmem:[#allocation8 + $0x40] sm:$0xff]
    %v119 = vld [vmem:[#allocation8 + $0x48] sm:$0xff]
    %v120 = vld [vmem:[#allocation8 + $0x50] sm:$0xff]
    %v121 = vld [vmem:[#allocation8 + $0x58] sm:$0xff]
    %v122 = vld [vmem:[#allocation8 + $0x60] sm:$0xff]
    %v123 = vld [vmem:[#allocation8 + $0x68] sm:$0xff]
    %v124 = vld [vmem:[#allocation8 + $0x70] sm:$0xff]
    %v125 = vld [vmem:[#allocation8 + $0x78] sm:$0xff]
    %v126 = vld [vmem:[%s6] sm:$0x1]
    %v127 = vld [vmem:[#allocation2] sm:$0xff]
    %v128 = vld [vmem:[#allocation2 + $0x8] sm:$0xff]
    %v130 = vperm.slane %v92, 0
    %vm132 = vcmask 130048
    %v134 = vsel %vm132, %v127, 0
    %v137 = vsel %vm132, %v128, 0
    %139 = vmatpush.msra.mxu0 0.0
    %140 = vmatpush.msra.mxu0 0.0
    %141 = vmatpush.msra.mxu0 0.0
    %142 = vmatpush.msra.mxu0 0.0
    %143 = vmatpush.msra.mxu0 0.0
    %144 = vmatpush.msra.mxu0 0.0
    %145 = vmatpush.msra.mxu0 0.0
    %146 = vmatpush.msra.mxu0 0.0
    %147 = vmatpush.msra.mxu0 0.0
    %148 = vmatpush.msra.mxu0 0.0
    %149 = vmatpush.msra.mxu0 0.0
    %150 = vmatpush.msra.mxu0 0.0
    %151 = vmatpush.msra.mxu0 0.0
    %152 = vmatpush.msra.mxu0 0.0
    %153 = vmatpush.msra.mxu0 %v91
    %154 = vmatpush.msra.mxu0 %v90
    %155 = vmatmul.f32.gmra.mxu0 %v134
    %v156 = vpop.f32.mrf.mxu0
    %v157 = vadd.f32 %v130, %v156
    %158 = vmatmul.f32.gmra.mxu0 %v137
    %v159 = vpop.f32.mrf.mxu0
    %v160 = vadd.f32 %v130, %v159
    %161 = vdwg.mxu0
    %v162 = vmax.f32 %v157, 0.0
    %v163 = vmax.f32 %v160, 0.0
    %v165 = vperm.slane %v109, 0
    %167 = vmatpush.msra.mxu0 %v108
    %168 = vmatpush.msra.mxu0 %v107
    %169 = vmatpush.msra.mxu0 %v106
    %170 = vmatpush.msra.mxu0 %v105
    %171 = vmatpush.msra.mxu0 %v104
    %172 = vmatpush.msra.mxu0 %v103
    %173 = vmatpush.msra.mxu0 %v102
    %174 = vmatpush.msra.mxu0 %v101
    %175 = vmatpush.msra.mxu0 %v100
    %176 = vmatpush.msra.mxu0 %v99
    %177 = vmatpush.msra.mxu0 %v98
    %178 = vmatpush.msra.mxu0 %v97
    %179 = vmatpush.msra.mxu0 %v96
    %180 = vmatpush.msra.mxu0 %v95
    %181 = vmatpush.msra.mxu0 %v94
    %182 = vmatpush.msra.mxu0 %v93
    %183 = vmatmul.f32.gmra.mxu0 %v162
    %v184 = vpop.f32.mrf.mxu0
    %v185 = vadd.f32 %v165, %v184
    %186 = vmatmul.f32.gmra.mxu0 %v163
    %v187 = vpop.f32.mrf.mxu0
    %v188 = vadd.f32 %v165, %v187
    %189 = vdwg.mxu0
    %v190 = vmax.f32 %v185, 0.0
    %v191 = vmax.f32 %v188, 0.0
    %v193 = vperm.slane %v126, 0
    %195 = vmatpush.msra.mxu0 %v125
    %196 = vmatpush.msra.mxu0 %v124
    %197 = vmatpush.msra.mxu0 %v123
    %198 = vmatpush.msra.mxu0 %v122
    %199 = vmatpush.msra.mxu0 %v121
    %200 = vmatpush.msra.mxu0 %v120
    %201 = vmatpush.msra.mxu0 %v119
    %202 = vmatpush.msra.mxu0 %v118
    %203 = vmatpush.msra.mxu0 %v117
    %204 = vmatpush.msra.mxu0 %v116
    %205 = vmatpush.msra.mxu0 %v115
    %206 = vmatpush.msra.mxu0 %v114
    %207 = vmatpush.msra.mxu0 %v113
    %208 = vmatpush.msra.mxu0 %v112
    %209 = vmatpush.msra.mxu0 %v111
    %210 = vmatpush.msra.mxu0 %v110
    %211 = vmatmul.f32.gmra.mxu0 %v190
    %v212 = vpop.f32.mrf.mxu0
    %v213 = vadd.f32 %v193, %v212
    %214 = vmatmul.f32.gmra.mxu0 %v191
    %v215 = vpop.f32.mrf.mxu0
    %v216 = vadd.f32 %v193, %v215
    %217 = vdwg.mxu0
    %218 = vst [vmem:[#allocation10] sm:$0xff] %v213
    %219 = vst [vmem:[#allocation10 + $0x8] sm:$0xff] %v216
    // Predicated region
    $region46: #{tpu_custom_call.1} parent=1 // pred_check
      _
    $region47: #{tpu_custom_call.1} parent=1 // pred_check_branch
      %221 = sbr.rel (0) target = $region49
    $region48: #{tpu_custom_call.1} parent=1 // pred_region
      %223 = vsyncadd [#allocation4], 0
      %s224 = sshll.u32 [#allocation10], 4
      %s225 = int_to_ptr.vmem [resolvable:$true] %s224
      %s226 = sshll.u32 %s7, 4
      %s227 = int_to_ptr.hbm [resolvable:$true] %s226
      %232 = dma.vmem_to_hbm [thread:$0]  %s225, 256, %s227, [#allocation4], 128, 128, 8
    $region49: #{tpu_custom_call.1} parent=1 // pred_fallthru
      _
    // Predicated region
    $region50: #{tpu_custom_call.1} parent=1 // pred_check
      _
    $region51: #{tpu_custom_call.1} parent=1 // pred_check_branch
      %234 = sbr.rel (0) target = $region53
    $region52: #{tpu_custom_call.1} parent=1 // pred_region
      %236 = dma.done [#allocation4], 256
    $region53: #{tpu_custom_call.1} parent=1 // pred_fallthru
      _
    %237 = vsyncpa [#allocation3], 1
    %238 = vsyncpa [#allocation6], 1
    %239 = vsyncpa [#allocation9], 1
    %240 = vsyncpa [#allocation4], 1

// kernel: tpu_custom_call.1
$region0: #{tpu_custom_call.1}
  #allocation0 [shape = 'u32[]', space=smem, size = 0x4, offset = 0x4, fixed_abs, tag = 'smem constant byte address 0x4 - core index']
  #allocation1 [shape = 'u32[72,128]{1,0:T(1,128)}', space=vmem, size = 0x9000, scoped, tag = 'internal scratch']
  %s0 = inlined_call_operand.hbm [shape: f32[16,16], index: 0, kind: input, shape index: {}]
  %s1 = inlined_call_operand.hbm [shape: f32[16,128], index: 1, kind: input, shape index: {}]
  %s2 = inlined_call_operand.vmem [shape: f32[1,128], index: 2, kind: input, shape index: {}]
  %s3 = inlined_call_operand.hbm [shape: f32[128,128], index: 3, kind: input, shape index: {}]
  %s4 = inlined_call_operand.vmem [shape: f32[1,128], index: 4, kind: input, shape index: {}]
  %s5 = inlined_call_operand.hbm [shape: f32[128,128], index: 5, kind: input, shape index: {}]
  %s6 = inlined_call_operand.vmem [shape: f32[1,128], index: 6, kind: input, shape index: {}]
  %s7 = inlined_call_operand.hbm [shape: f32[16,128], index: 7, kind: output, shape index: {}]
  %s8 = sld [smem:[#allocation0]]
  $region54: #{tpu_custom_call.1} parent=0
    _
  %s10 = ssub.s32 1, %s8
  %s11 = scalar_select 0, %s10, %s8
  $region1: #{tpu_custom_call.1} parent=0
    #allocation2 [shape = 'u8[8192]{0}', space=vmem, size = 0x2000, scoped, tag = 'input window, operand 0, single buffered']
    #allocation3 [shape = 's32[1]{0}', space=sflag, size = 0x4, scoped, tag = 'scoped memory for tpu_custom_call.1']
    #allocation4 [shape = 's32[1]{0}', space=sflag, size = 0x4, scoped, tag = 'scoped memory for tpu_custom_call.1']
    #allocation5 [shape = 'u8[8192]{0}', space=vmem, size = 0x2000, scoped, tag = 'input window, operand 1, single buffered']
    #allocation6 [shape = 's32[1]{0}', space=sflag, size = 0x4, scoped, tag = 'scoped memory for tpu_custom_call.1']
    #allocation7 [shape = 'u8[65536]{0}', space=vmem, size = 0x10000, scoped, tag = 'input window, operand 3, single buffered']
    #allocation8 [shape = 'u8[65536]{0}', space=vmem, size = 0x10000, scoped, tag = 'input window, operand 5, single buffered']
    #allocation9 [shape = 's32[1]{0}', space=sflag, size = 0x4, scoped, tag = 'scoped memory for tpu_custom_call.1']
    #allocation10 [shape = 'u8[8192]{0}', space=vmem, size = 0x2000, scoped, tag = 'output window, operand 0, single buffered']
    %12 = vsyncpa [#allocation3], 0
    %13 = vsyncpa [#allocation6], 0
    %14 = vsyncpa [#allocation9], 0
    %15 = vsyncpa [#allocation4], 0
    // Predicated region
    $region2: #{tpu_custom_call.1} parent=1 // pred_check
      _
    $region3: #{tpu_custom_call.1} parent=1 // pred_check_branch
      %17 = sbr.rel (0) target = $region5
    $region4: #{tpu_custom_call.1} parent=1 // pred_region
      %19 = vsyncadd [#allocation3], 0
      %s20 = sshll.u32 %s0, 4
      %s21 = int_to_ptr.hbm [resolvable:$true] %s20
      %s22 = sshll.u32 [#allocation2], 4
      %s23 = int_to_ptr.vmem [resolvable:$true] %s22
      %28 = dma.hbm_to_vmem [thread:$0]  %s21, 256, %s23, [#allocation3], 128, 128, 8
    $region5: #{tpu_custom_call.1} parent=1 // pred_fallthru
      _
    // Predicated region
    $region6: #{tpu_custom_call.1} parent=1 // pred_check
      _
    $region7: #{tpu_custom_call.1} parent=1 // pred_check_branch
      %30 = sbr.rel (0) target = $region9
    $region8: #{tpu_custom_call.1} parent=1 // pred_region
      %32 = vsyncadd [#allocation6], 0
      %s33 = sshll.u32 %s1, 4
      %s34 = int_to_ptr.hbm [resolvable:$true] %s33
      %s35 = sshll.u32 [#allocation5], 4
      %s36 = int_to_ptr.vmem [resolvable:$true] %s35
      %41 = dma.hbm_to_vmem [thread:$0]  %s34, 256, %s36, [#allocation6], 128, 128, 8
    $region9: #{tpu_custom_call.1} parent=1 // pred_fallthru
      _
    // Predicated region
    $region10: #{tpu_custom_call.1} parent=1 // pred_check
      _
    $region11: #{tpu_custom_call.1} parent=1 // pred_check_branch
      %43 = sbr.rel (0) target = $region13
    $region12: #{tpu_custom_call.1} parent=1 // pred_region
      _
    $region13: #{tpu_custom_call.1} parent=1 // pred_fallthru
      _
    // Predicated region
    $region14: #{tpu_custom_call.1} parent=1 // pred_check
      _
    $region15: #{tpu_custom_call.1} parent=1 // pred_check_branch
      %45 = sbr.rel (0) target = $region17
    $region16: #{tpu_custom_call.1} parent=1 // pred_region
      %47 = vsyncadd [#allocation6], 0
      %s48 = sshll.u32 %s3, 4
      %s49 = int_to_ptr.hbm [resolvable:$true] %s48
      %s50 = sshll.u32 [#allocation7], 4
      %s51 = int_to_ptr.vmem [resolvable:$true] %s50
      %56 = dma.hbm_to_vmem [thread:$0]  %s49, 2048, %s51, [#allocation6], 128, 128, 8
    $region17: #{tpu_custom_call.1} parent=1 // pred_fallthru
      _
    // Predicated region
    $region18: #{tpu_custom_call.1} parent=1 // pred_check
      _
    $region19: #{tpu_custom_call.1} parent=1 // pred_check_branch
      %58 = sbr.rel (0) target = $region21
    $region20: #{tpu_custom_call.1} parent=1 // pred_region
      _
    $region21: #{tpu_custom_call.1} parent=1 // pred_fallthru
      _
    // Predicated region
    $region22: #{tpu_custom_call.1} parent=1 // pred_check
      _
    $region23: #{tpu_custom_call.1} parent=1 // pred_check_branch
      %60 = sbr.rel (0) target = $region25
    $region24: #{tpu_custom_call.1} parent=1 // pred_region
      %62 = vsyncadd [#allocation9], 0
      %s63 = sshll.u32 %s5, 4
      %s64 = int_to_ptr.hbm [resolvable:$true] %s63
      %s65 = sshll.u32 [#allocation8], 4
      %s66 = int_to_ptr.vmem [resolvable:$true] %s65
      %71 = dma.hbm_to_vmem [thread:$0]  %s64, 2048, %s66, [#allocation9], 128, 128, 8
    $region25: #{tpu_custom_call.1} parent=1 // pred_fallthru
      _
    // Predicated region
    $region26: #{tpu_custom_call.1} parent=1 // pred_check
      _
    $region27: #{tpu_custom_call.1} parent=1 // pred_check_branch
      %73 = sbr.rel (0) target = $region29
    $region28: #{tpu_custom_call.1} parent=1 // pred_region
      _
    $region29: #{tpu_custom_call.1} parent=1 // pred_fallthru
      _
    // Predicated region
    $region30: #{tpu_custom_call.1} parent=1 // pred_check
      _
    $region31: #{tpu_custom_call.1} parent=1 // pred_check_branch
      %75 = sbr.rel (0) target = $region33
    $region32: #{tpu_custom_call.1} parent=1 // pred_region
      %77 = dma.done [#allocation3], 256
    $region33: #{tpu_custom_call.1} parent=1 // pred_fallthru
      _
    // Predicated region
    $region34: #{tpu_custom_call.1} parent=1 // pred_check
      _
    $region35: #{tpu_custom_call.1} parent=1 // pred_check_branch
      %79 = sbr.rel (0) target = $region37
    $region36: #{tpu_custom_call.1} parent=1 // pred_region
      %81 = dma.done [#allocation6], 256
    $region37: #{tpu_custom_call.1} parent=1 // pred_fallthru
      _
    // Predicated region
    $region38: #{tpu_custom_call.1} parent=1 // pred_check
      _
    $region39: #{tpu_custom_call.1} parent=1 // pred_check_branch
      %83 = sbr.rel (0) target = $region41
    $region40: #{tpu_custom_call.1} parent=1 // pred_region
      %85 = dma.done [#allocation6], 2048
    $region41: #{tpu_custom_call.1} parent=1 // pred_fallthru
      _
    // Predicated region
    $region42: #{tpu_custom_call.1} parent=1 // pred_check
      _
    $region43: #{tpu_custom_call.1} parent=1 // pred_check_branch
      %87 = sbr.rel (0) target = $region45
    $region44: #{tpu_custom_call.1} parent=1 // pred_region
      %89 = dma.done [#allocation9], 2048
    $region45: #{tpu_custom_call.1} parent=1 // pred_fallthru
      _
    %v90 = vld [vmem:[#allocation5] sm:$0xff]
    %v91 = vld [vmem:[#allocation5 + $0x8] sm:$0xff]
    %v92 = vld [vmem:[%s2] sm:$0x1]
    %v93 = vld [vmem:[#allocation7] sm:$0xff]
    %v94 = vld [vmem:[#allocation7 + $0x8] sm:$0xff]
    %v95 = vld [vmem:[#allocation7 + $0x10] sm:$0xff]
    %v96 = vld [vmem:[#allocation7 + $0x18] sm:$0xff]
    %v97 = vld [vmem:[#allocation7 + $0x20] sm:$0xff]
    %v98 = vld [vmem:[#allocation7 + $0x28] sm:$0xff]
    %v99 = vld [vmem:[#allocation7 + $0x30] sm:$0xff]
    %v100 = vld [vmem:[#allocation7 + $0x38] sm:$0xff]
    %v101 = vld [vmem:[#allocation7 + $0x40] sm:$0xff]
    %v102 = vld [vmem:[#allocation7 + $0x48] sm:$0xff]
    %v103 = vld [vmem:[#allocation7 + $0x50] sm:$0xff]
    %v104 = vld [vmem:[#allocation7 + $0x58] sm:$0xff]
    %v105 = vld [vmem:[#allocation7 + $0x60] sm:$0xff]
    %v106 = vld [vmem:[#allocation7 + $0x68] sm:$0xff]
    %v107 = vld [vmem:[#allocation7 + $0x70] sm:$0xff]
    %v108 = vld [vmem:[#allocation7 + $0x78] sm:$0xff]
    %v109 = vld [vmem:[%s4] sm:$0x1]
    %v110 = vld [vmem:[#allocation8] sm:$0xff]
    %v111 = vld [vmem:[#allocation8 + $0x8] sm:$0xff]
    %v112 = vld [vmem:[#allocation8 + $0x10] sm:$0xff]
    %v113 = vld [vmem:[#allocation8 + $0x18] sm:$0xff]
    %v114 = vld [vmem:[#allocation8 + $0x20] sm:$0xff]
    %v115 = vld [vmem:[#allocation8 + $0x28] sm:$0xff]
    %v116 = vld [vmem:[#allocation8 + $0x30] sm:$0xff]
    %v117 = vld [vmem:[#allocation8 + $0x38] sm:$0xff]
    %v118 = vld [vmem:[#allocation8 + $0x40] sm:$0xff]
    %v119 = vld [vmem:[#allocation8 + $0x48] sm:$0xff]
    %v120 = vld [vmem:[#allocation8 + $0x50] sm:$0xff]
    %v121 = vld [vmem:[#allocation8 + $0x58] sm:$0xff]
    %v122 = vld [vmem:[#allocation8 + $0x60] sm:$0xff]
    %v123 = vld [vmem:[#allocation8 + $0x68] sm:$0xff]
    %v124 = vld [vmem:[#allocation8 + $0x70] sm:$0xff]
    %v125 = vld [vmem:[#allocation8 + $0x78] sm:$0xff]
    %v126 = vld [vmem:[%s6] sm:$0x1]
    %v127 = vld [vmem:[#allocation2] sm:$0xff]
    %v128 = vld [vmem:[#allocation2 + $0x8] sm:$0xff]
    %v130 = vperm.slane %v92, 0
    %vm132 = vcmask 130048
    %v134 = vsel %vm132, %v127, 0
    %v137 = vsel %vm132, %v128, 0
    %139 = vmatpush.msra.mxu0 0.0
    %140 = vmatpush.msra.mxu0 0.0
    %141 = vmatpush.msra.mxu0 0.0
    %142 = vmatpush.msra.mxu0 0.0
    %143 = vmatpush.msra.mxu0 0.0
    %144 = vmatpush.msra.mxu0 0.0
    %145 = vmatpush.msra.mxu0 0.0
    %146 = vmatpush.msra.mxu0 0.0
    %147 = vmatpush.msra.mxu0 0.0
    %148 = vmatpush.msra.mxu0 0.0
    %149 = vmatpush.msra.mxu0 0.0
    %150 = vmatpush.msra.mxu0 0.0
    %151 = vmatpush.msra.mxu0 0.0
    %152 = vmatpush.msra.mxu0 0.0
    %153 = vmatpush.msra.mxu0 %v91
    %154 = vmatpush.msra.mxu0 %v90
    %155 = vmatmul.f32.gmra.mxu0 %v134
    %v156 = vpop.f32.mrf.mxu0
    %v157 = vadd.f32 %v130, %v156
    %158 = vmatmul.f32.gmra.mxu0 %v137
    %v159 = vpop.f32.mrf.mxu0
    %v160 = vadd.f32 %v130, %v159
    %161 = vdwg.mxu0
    %v162 = vmax.f32 %v157, 0.0
    %v163 = vmax.f32 %v160, 0.0
    %v165 = vperm.slane %v109, 0
    %167 = vmatpush.msra.mxu0 %v108
    %168 = vmatpush.msra.mxu0 %v107
    %169 = vmatpush.msra.mxu0 %v106
    %170 = vmatpush.msra.mxu0 %v105
    %171 = vmatpush.msra.mxu0 %v104
    %172 = vmatpush.msra.mxu0 %v103
    %173 = vmatpush.msra.mxu0 %v102
    %174 = vmatpush.msra.mxu0 %v101
    %175 = vmatpush.msra.mxu0 %v100
    %176 = vmatpush.msra.mxu0 %v99
    %177 = vmatpush.msra.mxu0 %v98
    %178 = vmatpush.msra.mxu0 %v97
    %179 = vmatpush.msra.mxu0 %v96
    %180 = vmatpush.msra.mxu0 %v95
    %181 = vmatpush.msra.mxu0 %v94
    %182 = vmatpush.msra.mxu0 %v93
    %183 = vmatmul.f32.gmra.mxu0 %v162
    %v184 = vpop.f32.mrf.mxu0
    %v185 = vadd.f32 %v165, %v184
    %186 = vmatmul.f32.gmra.mxu0 %v163
    %v187 = vpop.f32.mrf.mxu0
    %v188 = vadd.f32 %v165, %v187
    %189 = vdwg.mxu0
    %v190 = vmax.f32 %v185, 0.0
    %v191 = vmax.f32 %v188, 0.0
    %v193 = vperm.slane %v126, 0
    %195 = vmatpush.msra.mxu0 %v125
    %196 = vmatpush.msra.mxu0 %v124
    %197 = vmatpush.msra.mxu0 %v123
    %198 = vmatpush.msra.mxu0 %v122
    %199 = vmatpush.msra.mxu0 %v121
    %200 = vmatpush.msra.mxu0 %v120
    %201 = vmatpush.msra.mxu0 %v119
    %202 = vmatpush.msra.mxu0 %v118
    %203 = vmatpush.msra.mxu0 %v117
    %204 = vmatpush.msra.mxu0 %v116
    %205 = vmatpush.msra.mxu0 %v115
    %206 = vmatpush.msra.mxu0 %v114
    %207 = vmatpush.msra.mxu0 %v113
    %208 = vmatpush.msra.mxu0 %v112
    %209 = vmatpush.msra.mxu0 %v111
    %210 = vmatpush.msra.mxu0 %v110
    %211 = vmatmul.f32.gmra.mxu0 %v190
    %v212 = vpop.f32.mrf.mxu0
    %v213 = vadd.f32 %v193, %v212
    %214 = vmatmul.f32.gmra.mxu0 %v191
    %v215 = vpop.f32.mrf.mxu0
    %v216 = vadd.f32 %v193, %v215
    %217 = vdwg.mxu0
    %218 = vst [vmem:[#allocation10] sm:$0xff] %v213
    %219 = vst [vmem:[#allocation10 + $0x8] sm:$0xff] %v216
    // Predicated region
    $region46: #{tpu_custom_call.1} parent=1 // pred_check
      _
    $region47: #{tpu_custom_call.1} parent=1 // pred_check_branch
      %221 = sbr.rel (0) target = $region49
    $region48: #{tpu_custom_call.1} parent=1 // pred_region
      %223 = vsyncadd [#allocation4], 0
      %s224 = sshll.u32 [#allocation10], 4
      %s225 = int_to_ptr.vmem [resolvable:$true] %s224
      %s226 = sshll.u32 %s7, 4
      %s227 = int_to_ptr.hbm [resolvable:$true] %s226
      %232 = dma.vmem_to_hbm [thread:$0]  %s225, 256, %s227, [#allocation4], 128, 128, 8
    $region49: #{tpu_custom_call.1} parent=1 // pred_fallthru
      _
    // Predicated region
    $region50: #{tpu_custom_call.1} parent=1 // pred_check
      _
    $region51: #{tpu_custom_call.1} parent=1 // pred_check_branch
      %234 = sbr.rel (0) target = $region53
    $region52: #{tpu_custom_call.1} parent=1 // pred_region
      %236 = dma.done [#allocation4], 256
    $region53: #{tpu_custom_call.1} parent=1 // pred_fallthru
      _
    %237 = vsyncpa [#allocation3], 1
    %238 = vsyncpa [#allocation6], 1
    %239 = vsyncpa [#allocation9], 1
    %240 = vsyncpa [#allocation4], 1

</llo_original>
